<compile_context>
chip_gen: v7x
topology: tpu7x:2x2x1
jax: 0.10.0
libtpu: 0.0.40
codegen_flags: <defaults>
</compile_context>

<pallas_src>
import math
import functools

import jax
import jax.numpy as jnp
from jax.experimental import pallas as pl
from jax.experimental.pallas import tpu as pltpu


OPERATION_NUMBER = 3   # -> 6 mixed ops
HIDDEN = 32            # intermediate width in channel_list

# Parameter-slab layout (f32, lane width = max(C+1, 33), 8-aligned row segments)
_R_WX = 0      # rows 0..64   : [W0^T|b0 ; W1^T|b1 ; W3^T|b3]  -> (65, C+1)
_R_WT1 = 72    # rows 72..104 : [W2^T|b2 ; W4^T|b4]            -> (33, 33)
_R_WT2 = 112   # rows 112..144: [W5 ; b5] as a column           -> (33, 1)
_SLAB_ROWS = 152


def _cell_kernel(x_ref, p_ref, o_ref, *, C, BP):
    """Fused SAM cell on one (BP*C, T) slab of pixels.

    Layout: channels (BP packed batches) on sublanes, spatial pixels on lanes.
    """
    H = HIDDEN
    T = x_ref.shape[-1]
    x = x_ref[...].astype(jnp.float32)                                  # (BP*C, T)

    # ---- loop-invariant parameter loads (hoisted out of the batch loop) ----
    wt1b = p_ref[_R_WT1:_R_WT1 + H + 1, 0:H + 1].astype(jnp.bfloat16)   # (33, 33)
    w5c = p_ref[_R_WT2:_R_WT2 + H, 0:1]                                 # (32, 1)
    b5 = p_ref[_R_WT2 + H:_R_WT2 + H + 1, 0:1]                          # (1, 1)
    ones_row = jnp.ones((1, T), jnp.float32)

    small_c = C <= 8   # rank-1 VPU path only pays off for tiny K
    if small_c:
        wx_cols = [p_ref[_R_WX:_R_WX + 2 * H + 1, k:k + 1] for k in range(C)]
        yx_bias = jnp.broadcast_to(p_ref[_R_WX:_R_WX + 2 * H + 1, C:C + 1],
                                   (2 * H + 1, T))
    else:
        wxb = p_ref[_R_WX:_R_WX + 2 * H + 1, 0:C + 1].astype(jnp.bfloat16)

    atts = []
    for b in range(BP):                       # static unroll over packed batches
        base = b * C

        # ---- ops reading the raw input (op0, op1, op3), biases folded ----
        if small_c:
            # (65, C+1) @ (C+1, T) as C rank-1 VPU FMAs; bias = accumulator init.
            y_x = yx_bias
            for k in range(C):
                y_x = y_x + wx_cols[k] * x[base + k:base + k + 1, :]
        else:
            xb = jnp.concatenate([x[base:base + C, :], ones_row], axis=0)
            y_x = jnp.dot(wxb, xb.astype(jnp.bfloat16),
                          preferred_element_type=jnp.float32)

        # node1 = relu(op0(x))
        t1 = jnp.maximum(y_x[0:H, :], 0.0)

        # ops reading node1 (op2, op4): the only MXU matmul, bf16 x bf16 -> f32
        t1b = jnp.concatenate([t1, ones_row], axis=0).astype(jnp.bfloat16)  # (33, T)
        y_t1 = jnp.dot(wt1b, t1b, preferred_element_type=jnp.float32)       # (33, T)

        # node2 = relu(op1(x)) + relu(op2(node1))
        t2 = jnp.maximum(y_x[H:2 * H, :], 0.0) + jnp.maximum(y_t1[0:H, :], 0.0)

        # op5(node2): (1,32)@(32,T) as VPU multiply + XLU sublane reduce
        y_t2 = jnp.sum(w5c * t2, axis=0, keepdims=True) + b5                # (1, T)

        # attention = (sig(op3(x)) + sig(op4(node1)) + sig(op5(node2))) / 3
        att = (jax.nn.sigmoid(y_x[2 * H:2 * H + 1, :])
               + jax.nn.sigmoid(y_t1[H:H + 1, :])
               + jax.nn.sigmoid(y_t2)) * (1.0 / OPERATION_NUMBER)
        atts.append(att)

    # SAM: input_x * attention (attention broadcasts over each batch's C rows)
    att_full = jnp.concatenate(
        [jnp.broadcast_to(a, (C, T)) for a in atts], axis=0)                # (BP*C, T)
    o_ref[...] = (x * att_full).astype(o_ref.dtype)


def init_cell_params(C, key):
    """Deterministic params for the 6 mixed ops of a 3-op SAM cell.

    Edges (in_C -> out_C), in MixedOp order:
      (C->32), (C->32), (32->32), (C->1), (32->1), (32->1)
    Weights stored as (in_C, out_C); biases as (1, out_C).
    """
    edges = [(C, HIDDEN), (C, HIDDEN), (HIDDEN, HIDDEN),
             (C, 1), (HIDDEN, 1), (HIDDEN, 1)]
    params = []
    keys = jax.random.split(key, 2 * len(edges))
    for k, (cin, cout) in enumerate(edges):
        scale = 1.0 / math.sqrt(cin)
        w = scale * jax.random.normal(keys[2 * k], (cin, cout), jnp.float32)
        b = scale * jax.random.normal(keys[2 * k + 1], (1, cout), jnp.float32)
        params.append((w, b))
    return params


def pack_cell_params(params, C):
    """Pack all 6 (w, b) pairs into one f32 slab, biases folded as extra cols."""
    (w0, b0), (w1, b1), (w2, b2), (w3, b3), (w4, b4), (w5, b5) = params
    ncol = max(C + 1, HIDDEN + 1)
    slab = jnp.zeros((_SLAB_ROWS, ncol), jnp.float32)

    wxb = jnp.concatenate([jnp.concatenate([w0.T, b0.T], axis=1),
                           jnp.concatenate([w1.T, b1.T], axis=1),
                           jnp.concatenate([w3.T, b3.T], axis=1)], axis=0)  # (65, C+1)
    wt1b = jnp.concatenate([jnp.concatenate([w2.T, b2.T], axis=1),
                            jnp.concatenate([w4.T, b4.T], axis=1)], axis=0)  # (33, 33)
    wt2col = jnp.concatenate([w5, b5], axis=0)                               # (33, 1)

    slab = slab.at[_R_WX:_R_WX + 2 * HIDDEN + 1, 0:C + 1].set(wxb)
    slab = slab.at[_R_WT1:_R_WT1 + HIDDEN + 1, 0:HIDDEN + 1].set(wt1b)
    slab = slab.at[_R_WT2:_R_WT2 + HIDDEN + 1, 0:1].set(wt2col)
    return slab


def _pick_bp(B, C):
    """Batches packed per row block so BP*C fills 8 f32 sublanes when possible."""
    if C % 8 == 0:
        return 1
    bp = 8 // math.gcd(C, 8)
    if B % bp == 0:
        return bp
    return B   # row block == full (B*C) dim -> always a legal block shape


def _pick_tile_s(hw, n_row_blocks, cap=512):
    """Spatial (lane) tile: <= cap, multiple of 128, prefer 256-multiples
    (v6e/v7x MXU lane width) and >=4 grid steps (v7x: 2 TCs), else >=2."""
    if hw <= 128:
        return hw                                   # full row == full array dim
    cap = max(128, min((cap // 128) * 128, (hw // 128) * 128))
    cands = list(range(cap, 127, -128))
    steps = lambda t: n_row_blocks * (-(-hw // t))
    for min_steps in (4, 2):
        for pref256 in (True, False):
            for t in cands:
                if pref256 and t % 256 != 0:
                    continue
                if steps(t) >= min_steps:
                    return t
    return cands[0]


@jax.jit
def cell_forward(x_nchw, slab):
    """SAM Cell forward. x_nchw: (B, C, H, W) -> (B, C, H, W)."""
    B, C, H, W = x_nchw.shape
    HW = H * W

    BP = _pick_bp(B, C)
    RB = BP * C
    n_row_blocks = (B * C) // RB
    T = _pick_tile_s(HW, n_row_blocks, cap=max(128, 512 // BP))

    x2 = x_nchw.reshape(B * C, HW)       # free reshape; NCHW consumed directly

    kernel = functools.partial(_cell_kernel, C=C, BP=BP)
    out2 = pl.pallas_call(
        kernel,
        out_shape=jax.ShapeDtypeStruct((B * C, HW), x_nchw.dtype),
        grid=(n_row_blocks, pl.cdiv(HW, T)),
        in_specs=[pl.BlockSpec((RB, T), lambda r, s: (r, s)),
                  pl.BlockSpec(slab.shape, lambda r, s: (0, 0))],   # resident params
        out_specs=pl.BlockSpec((RB, T), lambda r, s: (r, s)),
        compiler_params=pltpu.CompilerParams(
            dimension_semantics=("parallel", "parallel")),
    )(x2, slab)

    return out2.reshape(B, C, H, W)


def cell_forward_ref(x_nchw, params):
    """Pure-JAX f32 reference mirroring the PyTorch forward (SAM)."""
    B, C, H, W = x_nchw.shape
    x = jnp.transpose(x_nchw, (0, 2, 3, 1)).reshape(B * H * W, C)

    def conv(t, wb):
        w, b = wb
        return t @ w + b

    t1 = jax.nn.relu(conv(x, params[0]))
    t2 = jax.nn.relu(conv(x, params[1])) + jax.nn.relu(conv(t1, params[2]))
    att = (jax.nn.sigmoid(conv(x, params[3]))
           + jax.nn.sigmoid(conv(t1, params[4]))
           + jax.nn.sigmoid(conv(t2, params[5]))) / float(OPERATION_NUMBER)
    out = x * att
    return jnp.transpose(out.reshape(B, H, W, C), (0, 3, 1, 2))


if __name__ == "__main__":
    key = jax.random.PRNGKey(0)
    k_x, k_p = jax.random.split(key)

    B, C, H, W = 2, 4, 16, 16
    x = jax.random.normal(k_x, (B, C, H, W), jnp.float32)

    params = init_cell_params(C, k_p)
    slab = pack_cell_params(params, C)

    out = jax.block_until_ready(cell_forward(x, slab))
    ref = cell_forward_ref(x, params)

    assert out.shape == (B, C, H, W)
    # bf16 operands on the wt1 matmul -> loosened tolerance vs the f32 reference
    assert jnp.allclose(out, ref, atol=3e-2, rtol=3e-2), "mismatch vs reference"

    print("KERNEL_OK")
</pallas_src>

<mosaic_0001>
module attributes {stable_mosaic.version = 11 : i64} {
  func.func @_cell_kernel(%arg0: i32, %arg1: i32, %arg2: memref<8x128xf32, #tpu.memory_space<vmem>>, %arg3: memref<152x33xf32, #tpu.memory_space<vmem>>, %arg4: memref<8x128xf32, #tpu.memory_space<vmem>>) attributes {dimension_semantics = [#tpu.dimension_semantics<parallel>, #tpu.dimension_semantics<parallel>], iteration_bounds = array<i64: 1, 2>, scalar_prefetch = 0 : i64, scratch_operands = 0 : i64, tpu.core_type = #tpu.core_type<tc>, window_params = [{transform_indices = @transform_0, window_bounds = array<i64: 8, 128>}, {pipeline_mode = #tpu.pipeline_mode<synchronous>, transform_indices = @transform_1, window_bounds = array<i64: 152, 33>}, {transform_indices = @transform_2, window_bounds = array<i64: 8, 128>}]} {
    %c0 = arith.constant 0 : index
    %c0_0 = arith.constant 0 : index
    %0 = vector.load %arg2[%c0, %c0_0] : memref<8x128xf32, #tpu.memory_space<vmem>>, vector<8x128xf32>
    %c72 = arith.constant 72 : index
    %c0_1 = arith.constant 0 : index
    %1 = vector.load %arg3[%c72, %c0_1] : memref<152x33xf32, #tpu.memory_space<vmem>>, vector<33x33xf32>
    %2 = arith.truncf %1 : vector<33x33xf32> to vector<33x33xbf16>
    %c112 = arith.constant 112 : index
    %c0_2 = arith.constant 0 : index
    %3 = vector.load %arg3[%c112, %c0_2] : memref<152x33xf32, #tpu.memory_space<vmem>>, vector<32x1xf32>
    %c144 = arith.constant 144 : index
    %c0_3 = arith.constant 0 : index
    %4 = vector.load %arg3[%c144, %c0_3] : memref<152x33xf32, #tpu.memory_space<vmem>>, vector<1x1xf32>
    %cst = arith.constant 1.000000e+00 : f32
    %5 = vector.broadcast %cst : f32 to vector<1x128xf32>
    %c0_4 = arith.constant 0 : index
    %c0_5 = arith.constant 0 : index
    %6 = vector.load %arg3[%c0_4, %c0_5] : memref<152x33xf32, #tpu.memory_space<vmem>>, vector<65x1xf32>
    %c0_6 = arith.constant 0 : index
    %c1 = arith.constant 1 : index
    %7 = vector.load %arg3[%c0_6, %c1] : memref<152x33xf32, #tpu.memory_space<vmem>>, vector<65x1xf32>
    %c0_7 = arith.constant 0 : index
    %c2 = arith.constant 2 : index
    %8 = vector.load %arg3[%c0_7, %c2] : memref<152x33xf32, #tpu.memory_space<vmem>>, vector<65x1xf32>
    %c0_8 = arith.constant 0 : index
    %c3 = arith.constant 3 : index
    %9 = vector.load %arg3[%c0_8, %c3] : memref<152x33xf32, #tpu.memory_space<vmem>>, vector<65x1xf32>
    %c0_9 = arith.constant 0 : index
    %c4 = arith.constant 4 : index
    %10 = vector.load %arg3[%c0_9, %c4] : memref<152x33xf32, #tpu.memory_space<vmem>>, vector<65x1xf32>
    %11 = vector.shape_cast %10 : vector<65x1xf32> to vector<65x1xf32>
    %12 = vector.broadcast %11 : vector<65x1xf32> to vector<65x128xf32>
    %13 = vector.extract_strided_slice %0 {offsets = [0, 0], sizes = [1, 128], strides = [1, 1]} : vector<8x128xf32> to vector<1x128xf32>
    %14 = vector.broadcast %6 : vector<65x1xf32> to vector<65x128xf32>
    %15 = vector.broadcast %13 : vector<1x128xf32> to vector<65x128xf32>
    %16 = arith.mulf %14, %15 : vector<65x128xf32>
    %17 = arith.addf %12, %16 : vector<65x128xf32>
    %18 = vector.extract_strided_slice %0 {offsets = [1, 0], sizes = [1, 128], strides = [1, 1]} : vector<8x128xf32> to vector<1x128xf32>
    %19 = vector.broadcast %7 : vector<65x1xf32> to vector<65x128xf32>
    %20 = vector.broadcast %18 : vector<1x128xf32> to vector<65x128xf32>
    %21 = arith.mulf %19, %20 : vector<65x128xf32>
    %22 = arith.addf %17, %21 : vector<65x128xf32>
    %23 = vector.extract_strided_slice %0 {offsets = [2, 0], sizes = [1, 128], strides = [1, 1]} : vector<8x128xf32> to vector<1x128xf32>
    %24 = vector.broadcast %8 : vector<65x1xf32> to vector<65x128xf32>
    %25 = vector.broadcast %23 : vector<1x128xf32> to vector<65x128xf32>
    %26 = arith.mulf %24, %25 : vector<65x128xf32>
    %27 = arith.addf %22, %26 : vector<65x128xf32>
    %28 = vector.extract_strided_slice %0 {offsets = [3, 0], sizes = [1, 128], strides = [1, 1]} : vector<8x128xf32> to vector<1x128xf32>
    %29 = vector.broadcast %9 : vector<65x1xf32> to vector<65x128xf32>
    %30 = vector.broadcast %28 : vector<1x128xf32> to vector<65x128xf32>
    %31 = arith.mulf %29, %30 : vector<65x128xf32>
    %32 = arith.addf %27, %31 : vector<65x128xf32>
    %33 = vector.extract_strided_slice %32 {offsets = [0, 0], sizes = [32, 128], strides = [1, 1]} : vector<65x128xf32> to vector<32x128xf32>
    %cst_10 = arith.constant 0.000000e+00 : f32
    %34 = vector.broadcast %cst_10 : f32 to vector<32x128xf32>
    %35 = arith.maximumf %33, %34 : vector<32x128xf32>
    %36 = tpu.concatenate %35, %5 in 0 : vector<32x128xf32>, vector<1x128xf32> -> vector<33x128xf32>
    %37 = arith.truncf %36 : vector<33x128xf32> to vector<33x128xbf16>
    %cst_11 = arith.constant dense<0.000000e+00> : vector<33x128xf32>
    %38 = tpu.matmul %2, %37, %cst_11 {dimension_numbers = #tpu.dot_dimension_numbers<[1], [0], [0], [1], [0, 0, 1, 1], [], []>} : vector<33x33xbf16>, vector<33x128xbf16>, vector<33x128xf32> -> vector<33x128xf32>
    %39 = vector.extract_strided_slice %32 {offsets = [32, 0], sizes = [32, 128], strides = [1, 1]} : vector<65x128xf32> to vector<32x128xf32>
    %cst_12 = arith.constant 0.000000e+00 : f32
    %40 = vector.broadcast %cst_12 : f32 to vector<32x128xf32>
    %41 = arith.maximumf %39, %40 : vector<32x128xf32>
    %42 = vector.extract_strided_slice %38 {offsets = [0, 0], sizes = [32, 128], strides = [1, 1]} : vector<33x128xf32> to vector<32x128xf32>
    %cst_13 = arith.constant 0.000000e+00 : f32
    %43 = vector.broadcast %cst_13 : f32 to vector<32x128xf32>
    %44 = arith.maximumf %42, %43 : vector<32x128xf32>
    %45 = arith.addf %41, %44 : vector<32x128xf32>
    %46 = vector.broadcast %3 : vector<32x1xf32> to vector<32x128xf32>
    %47 = arith.mulf %46, %45 : vector<32x128xf32>
    %cst_14 = arith.constant dense<0.000000e+00> : vector<128xf32>
    %48 = vector.multi_reduction <add>, %47, %cst_14 [0] : vector<32x128xf32> to vector<128xf32>
    %49 = vector.shape_cast %48 : vector<128xf32> to vector<1x128xf32>
    %50 = vector.broadcast %4 : vector<1x1xf32> to vector<1x128xf32>
    %51 = arith.addf %49, %50 : vector<1x128xf32>
    %52 = vector.extract_strided_slice %32 {offsets = [64, 0], sizes = [1, 128], strides = [1, 1]} : vector<65x128xf32> to vector<1x128xf32>
    %53 = arith.negf %52 : vector<1x128xf32>
    %54 = math.exp %53 : vector<1x128xf32>
    %cst_15 = arith.constant 1.000000e+00 : f32
    %55 = vector.broadcast %cst_15 : f32 to vector<1x128xf32>
    %56 = arith.addf %55, %54 : vector<1x128xf32>
    %57 = arith.divf %55, %56 : vector<1x128xf32>
    %58 = vector.extract_strided_slice %38 {offsets = [32, 0], sizes = [1, 128], strides = [1, 1]} : vector<33x128xf32> to vector<1x128xf32>
    %59 = arith.negf %58 : vector<1x128xf32>
    %60 = math.exp %59 : vector<1x128xf32>
    %cst_16 = arith.constant 1.000000e+00 : f32
    %61 = vector.broadcast %cst_16 : f32 to vector<1x128xf32>
    %62 = arith.addf %61, %60 : vector<1x128xf32>
    %63 = arith.divf %61, %62 : vector<1x128xf32>
    %64 = arith.addf %57, %63 : vector<1x128xf32>
    %65 = arith.negf %51 : vector<1x128xf32>
    %66 = math.exp %65 : vector<1x128xf32>
    %cst_17 = arith.constant 1.000000e+00 : f32
    %67 = vector.broadcast %cst_17 : f32 to vector<1x128xf32>
    %68 = arith.addf %67, %66 : vector<1x128xf32>
    %69 = arith.divf %67, %68 : vector<1x128xf32>
    %70 = arith.addf %64, %69 : vector<1x128xf32>
    %cst_18 = arith.constant 0.333333343 : f32
    %71 = vector.broadcast %cst_18 : f32 to vector<1x128xf32>
    %72 = arith.mulf %70, %71 : vector<1x128xf32>
    %73 = vector.extract_strided_slice %0 {offsets = [4, 0], sizes = [1, 128], strides = [1, 1]} : vector<8x128xf32> to vector<1x128xf32>
    %74 = vector.broadcast %6 : vector<65x1xf32> to vector<65x128xf32>
    %75 = vector.broadcast %73 : vector<1x128xf32> to vector<65x128xf32>
    %76 = arith.mulf %74, %75 : vector<65x128xf32>
    %77 = arith.addf %12, %76 : vector<65x128xf32>
    %78 = vector.extract_strided_slice %0 {offsets = [5, 0], sizes = [1, 128], strides = [1, 1]} : vector<8x128xf32> to vector<1x128xf32>
    %79 = vector.broadcast %7 : vector<65x1xf32> to vector<65x128xf32>
    %80 = vector.broadcast %78 : vector<1x128xf32> to vector<65x128xf32>
    %81 = arith.mulf %79, %80 : vector<65x128xf32>
    %82 = arith.addf %77, %81 : vector<65x128xf32>
    %83 = vector.extract_strided_slice %0 {offsets = [6, 0], sizes = [1, 128], strides = [1, 1]} : vector<8x128xf32> to vector<1x128xf32>
    %84 = vector.broadcast %8 : vector<65x1xf32> to vector<65x128xf32>
    %85 = vector.broadcast %83 : vector<1x128xf32> to vector<65x128xf32>
    %86 = arith.mulf %84, %85 : vector<65x128xf32>
    %87 = arith.addf %82, %86 : vector<65x128xf32>
    %88 = vector.extract_strided_slice %0 {offsets = [7, 0], sizes = [1, 128], strides = [1, 1]} : vector<8x128xf32> to vector<1x128xf32>
    %89 = vector.broadcast %9 : vector<65x1xf32> to vector<65x128xf32>
    %90 = vector.broadcast %88 : vector<1x128xf32> to vector<65x128xf32>
    %91 = arith.mulf %89, %90 : vector<65x128xf32>
    %92 = arith.addf %87, %91 : vector<65x128xf32>
    %93 = vector.extract_strided_slice %92 {offsets = [0, 0], sizes = [32, 128], strides = [1, 1]} : vector<65x128xf32> to vector<32x128xf32>
    %cst_19 = arith.constant 0.000000e+00 : f32
    %94 = vector.broadcast %cst_19 : f32 to vector<32x128xf32>
    %95 = arith.maximumf %93, %94 : vector<32x128xf32>
    %96 = tpu.concatenate %95, %5 in 0 : vector<32x128xf32>, vector<1x128xf32> -> vector<33x128xf32>
    %97 = arith.truncf %96 : vector<33x128xf32> to vector<33x128xbf16>
    %cst_20 = arith.constant dense<0.000000e+00> : vector<33x128xf32>
    %98 = tpu.matmul %2, %97, %cst_20 {dimension_numbers = #tpu.dot_dimension_numbers<[1], [0], [0], [1], [0, 0, 1, 1], [], []>} : vector<33x33xbf16>, vector<33x128xbf16>, vector<33x128xf32> -> vector<33x128xf32>
    %99 = vector.extract_strided_slice %92 {offsets = [32, 0], sizes = [32, 128], strides = [1, 1]} : vector<65x128xf32> to vector<32x128xf32>
    %cst_21 = arith.constant 0.000000e+00 : f32
    %100 = vector.broadcast %cst_21 : f32 to vector<32x128xf32>
    %101 = arith.maximumf %99, %100 : vector<32x128xf32>
    %102 = vector.extract_strided_slice %98 {offsets = [0, 0], sizes = [32, 128], strides = [1, 1]} : vector<33x128xf32> to vector<32x128xf32>
    %cst_22 = arith.constant 0.000000e+00 : f32
    %103 = vector.broadcast %cst_22 : f32 to vector<32x128xf32>
    %104 = arith.maximumf %102, %103 : vector<32x128xf32>
    %105 = arith.addf %101, %104 : vector<32x128xf32>
    %106 = vector.broadcast %3 : vector<32x1xf32> to vector<32x128xf32>
    %107 = arith.mulf %106, %105 : vector<32x128xf32>
    %cst_23 = arith.constant dense<0.000000e+00> : vector<128xf32>
    %108 = vector.multi_reduction <add>, %107, %cst_23 [0] : vector<32x128xf32> to vector<128xf32>
    %109 = vector.shape_cast %108 : vector<128xf32> to vector<1x128xf32>
    %110 = vector.broadcast %4 : vector<1x1xf32> to vector<1x128xf32>
    %111 = arith.addf %109, %110 : vector<1x128xf32>
    %112 = vector.extract_strided_slice %92 {offsets = [64, 0], sizes = [1, 128], strides = [1, 1]} : vector<65x128xf32> to vector<1x128xf32>
    %113 = arith.negf %112 : vector<1x128xf32>
    %114 = math.exp %113 : vector<1x128xf32>
    %cst_24 = arith.constant 1.000000e+00 : f32
    %115 = vector.broadcast %cst_24 : f32 to vector<1x128xf32>
    %116 = arith.addf %115, %114 : vector<1x128xf32>
    %117 = arith.divf %115, %116 : vector<1x128xf32>
    %118 = vector.extract_strided_slice %98 {offsets = [32, 0], sizes = [1, 128], strides = [1, 1]} : vector<33x128xf32> to vector<1x128xf32>
    %119 = arith.negf %118 : vector<1x128xf32>
    %120 = math.exp %119 : vector<1x128xf32>
    %cst_25 = arith.constant 1.000000e+00 : f32
    %121 = vector.broadcast %cst_25 : f32 to vector<1x128xf32>
    %122 = arith.addf %121, %120 : vector<1x128xf32>
    %123 = arith.divf %121, %122 : vector<1x128xf32>
    %124 = arith.addf %117, %123 : vector<1x128xf32>
    %125 = arith.negf %111 : vector<1x128xf32>
    %126 = math.exp %125 : vector<1x128xf32>
    %cst_26 = arith.constant 1.000000e+00 : f32
    %127 = vector.broadcast %cst_26 : f32 to vector<1x128xf32>
    %128 = arith.addf %127, %126 : vector<1x128xf32>
    %129 = arith.divf %127, %128 : vector<1x128xf32>
    %130 = arith.addf %124, %129 : vector<1x128xf32>
    %cst_27 = arith.constant 0.333333343 : f32
    %131 = vector.broadcast %cst_27 : f32 to vector<1x128xf32>
    %132 = arith.mulf %130, %131 : vector<1x128xf32>
    %133 = vector.shape_cast %72 : vector<1x128xf32> to vector<1x128xf32>
    %134 = vector.broadcast %133 : vector<1x128xf32> to vector<4x128xf32>
    %135 = vector.shape_cast %132 : vector<1x128xf32> to vector<1x128xf32>
    %136 = vector.broadcast %135 : vector<1x128xf32> to vector<4x128xf32>
    %137 = tpu.concatenate %134, %136 in 0 : vector<4x128xf32>, vector<4x128xf32> -> vector<8x128xf32>
    %138 = arith.mulf %0, %137 : vector<8x128xf32>
    %c0_28 = arith.constant 0 : index
    %c0_29 = arith.constant 0 : index
    %139 = vector.load %arg4[%c0_28, %c0_29] : memref<8x128xf32, #tpu.memory_space<vmem>>, vector<8x128xf32>
    tpu.vector_store %arg4[%c0_28, %c0_29], %138 {strides = array<i32>} : memref<8x128xf32, #tpu.memory_space<vmem>>, vector<8x128xf32>,
    return
  }
  func.func @transform_0(%arg0: i32, %arg1: i32) -> (i32, i32) {
    %c0_i32 = arith.constant 0 : i32
    return %arg0, %arg1 : i32, i32
  }
  func.func @transform_1(%arg0: i32, %arg1: i32) -> (i32, i32) {
    %c0_i32 = arith.constant 0 : i32
    %c0_i32_0 = arith.constant 0 : i32
    %c0_i32_1 = arith.constant 0 : i32
    return %c0_i32, %c0_i32_0 : i32, i32
  }
  func.func @transform_2(%arg0: i32, %arg1: i32) -> (i32, i32) {
    %c0_i32 = arith.constant 0 : i32
    return %arg0, %arg1 : i32, i32
  }
}

</mosaic_0001>

<llo_original>
// kernel: cell_forward.1
$region0: #{cell_forward.1}
  #allocation0 [shape = 'u32[]', space=smem, size = 0x4, offset = 0x4, fixed_abs, tag = 'smem constant byte address 0x4 - core index']
  #allocation1 [shape = 'u32[144,128]{1,0:T(1,128)}', space=vmem, size = 0x12000, scoped, tag = 'internal scratch']
  %s0 = inlined_call_operand.vmem [shape: f32[8,256], index: 0, kind: input, shape index: {}]
  %s1 = inlined_call_operand.vmem [shape: f32[152,33], index: 1, kind: input, shape index: {}]
  %s2 = inlined_call_operand.vmem [shape: f32[8,256], index: 2, kind: output, shape index: {}]
  %s3 = sld [smem:[#allocation0]]
  $region41: #{cell_forward.1} parent=0
    _
  %s5 = ssub.s32 1, %s3
  %s6 = scalar_select 0, %s5, %s3
  loop: start=0, step=1, limit=4
  $region2: #{cell_forward.1} parent=0 // loop_pre_header
    _
  $region3: #{cell_forward.1} parent=0 // loop_header
    %s8 = sphi 0, %s12
    %p9 = scmp.ge.s32.totalorder %s8, 4
    %s15 = sphi 0, %s27
    %s16 = sphi 0, %s23
    %s17 = sphi 0, %s15
    %s18 = sphi 0, %s16
    %s19 = sphi 0, %s17
    %s20 = sphi 0, %s18
    %s32 = sphi 0, %s34
    %s35 = sphi 0, %s32
    %s36 = sphi 0, %s35
    %s52 = sphi 0, %s36
    %s56 = sphi 0, %s56
    %s58 = sphi 0, %s56
    %s59 = sphi 0, %s58
    %s73 = sphi 0, %s59
    %s81 = sphi 0, %s83
    %s84 = sphi 0, %s81
    %s85 = sphi 0, %s84
    %s101 = sphi 0, %s85
  $region4: #{cell_forward.1} parent=0 // loop_header_branch
    %11 = sbr.rel (%p9) target = $region8
  $region5: #{cell_forward.1} parent=0 // loop_body
    %s13 = ssub.s32 %s8, 1
    %s14 = ssub.s32 %s8, 2
    %s21 = sadd.s32 1, %s16
    %p22 = scmp.ge.s32.totalorder %s21, 2
    %s23 = scalar_select %p22, 0, %s21
    %s24 = sadd.s32 1, %s15
    %s25 = scalar_select %p22, %s24, %s15
    %p26 = scmp.ge.s32.totalorder %s25, 1
    %s27 = scalar_select %p26, 0, %s25
    %s28 = ssub.s32 %s15, %s27
    %s29 = ssub.s32 %s16, %s23
    %s30 = sor.u32 %s28, %s29
    %p31 = scmp.eq.s32.totalorder %s30, 0
    %s33 = sadd.s32 %s32, 1
    %s34 = scalar_select %p31, %s32, %s33
    %p37 = pneg %p31
    %p38 = scmp.eq.s32.totalorder %s8, 1
    %p39 = por %p37, %p38
    %p40 = scmp.ne.s32.totalorder %s32, %s35
    %p41 = scmp.eq.s32.totalorder %s8, 0
    %p42 = por %p40, %p41
    %p43 = scmp.ne.s32.totalorder %s32, %s35
    %p44 = scmp.eq.s32.totalorder %s13, 1
    %p45 = por %p43, %p44
    %p46 = scmp.ne.s32.totalorder %s35, %s36
    %p47 = scmp.eq.s32.totalorder %s13, 0
    %p48 = por %p46, %p47
    %p49 = scmp.ne.s32.totalorder %s35, %s36
    %p50 = scmp.eq.s32.totalorder %s14, 1
    %p51 = por %p49, %p50
    %p53 = scmp.ne.s32.totalorder %s36, %s52
    %p54 = scmp.eq.s32.totalorder %s14, 0
    %p55 = por %p53, %p54
    %s57 = sadd.s32 %s56, 1
    %p60 = scmp.eq.s32.totalorder %s8, 1
    %p61 = scmp.ne.s32.totalorder %s56, %s58
    %p62 = scmp.eq.s32.totalorder %s8, 0
    %p63 = por %p61, %p62
    %p64 = scmp.ne.s32.totalorder %s56, %s58
    %p65 = scmp.eq.s32.totalorder %s13, 1
    %p66 = por %p64, %p65
    %p67 = scmp.ne.s32.totalorder %s58, %s59
    %p68 = scmp.eq.s32.totalorder %s13, 0
    %p69 = por %p67, %p68
    %p70 = scmp.ne.s32.totalorder %s58, %s59
    %p71 = scmp.eq.s32.totalorder %s14, 1
    %p72 = por %p70, %p71
    %p74 = scmp.ne.s32.totalorder %s59, %s73
    %p75 = scmp.eq.s32.totalorder %s14, 0
    %p76 = por %p74, %p75
    %s77 = ssub.s32 %s15, %s27
    %s78 = ssub.s32 %s16, %s23
    %s79 = sor.u32 %s77, %s78
    %p80 = scmp.eq.s32.totalorder %s79, 0
    %s82 = sadd.s32 %s81, 1
    %s83 = scalar_select %p80, %s81, %s82
    %p86 = pneg %p80
    %p87 = scmp.eq.s32.totalorder %s8, 1
    %p88 = por %p86, %p87
    %p89 = scmp.ne.s32.totalorder %s81, %s84
    %p90 = scmp.eq.s32.totalorder %s8, 0
    %p91 = por %p89, %p90
    %p92 = scmp.ne.s32.totalorder %s81, %s84
    %p93 = scmp.eq.s32.totalorder %s13, 1
    %p94 = por %p92, %p93
    %p95 = scmp.ne.s32.totalorder %s84, %s85
    %p96 = scmp.eq.s32.totalorder %s13, 0
    %p97 = por %p95, %p96
    %p98 = scmp.ne.s32.totalorder %s84, %s85
    %p99 = scmp.eq.s32.totalorder %s14, 1
    %p100 = por %p98, %p99
    %p102 = scmp.ne.s32.totalorder %s85, %s101
    %p103 = scmp.eq.s32.totalorder %s14, 0
    %p104 = por %p102, %p103
    %p105 = scmp.le.s32.totalorder 1, %s8
    %p106 = scmp.lt.s32.totalorder %s8, 3
    %p107 = pnand %p105, %p106
    %p108 = pneg %p107
    // Predicated region
    $region9: #{cell_forward.1} parent=5 // pred_check
      _
    $region10: #{cell_forward.1} parent=5 // pred_check_branch
      %110 = sbr.rel (%p107) target = $region12
    $region11: #{cell_forward.1} parent=5 // pred_region
      %s111 = ssub.s32 %s8, 1
      // Predicated region
      $region13: #{cell_forward.1} parent=11 // pred_check
        %p112 = pneg %p69
      $region14: #{cell_forward.1} parent=11 // pred_check_branch
        %114 = sbr.rel (%p112) target = $region16
      $region15: #{cell_forward.1} parent=11 // pred_region
        _
      $region16: #{cell_forward.1} parent=11 // pred_fallthru
        _
    $region12: #{cell_forward.1} parent=5 // pred_fallthru
      _
    %p115 = scmp.lt.s32.totalorder %s8, 2
    // Predicated region
    $region17: #{cell_forward.1} parent=5 // pred_check
      %p116 = pneg %p115
    $region18: #{cell_forward.1} parent=5 // pred_check_branch
      %118 = sbr.rel (%p116) target = $region20
    $region19: #{cell_forward.1} parent=5 // pred_region
      // Predicated region
      $region21: #{cell_forward.1} parent=19 // pred_check
        %p119 = pneg %p42
      $region22: #{cell_forward.1} parent=19 // pred_check_branch
        %121 = sbr.rel (%p119) target = $region24
      $region23: #{cell_forward.1} parent=19 // pred_region
        %p122 = scmp.lt.s32.totalorder %s15, 0
        %s123 = scalar_select %p122, %s15, 0
        %p124 = scmp.lt.s32.totalorder %s16, 1
        %s125 = scalar_select %p124, %s16, 1
        %s126 = smul.addr %s123, 2
        %s127 = sadd.s32 %s125, %s126
        %s128 = smul.addr %s127, 8
        %s129 = scalar_lea.vmem %s0, %s128
      $region24: #{cell_forward.1} parent=19 // pred_fallthru
        _
    $region20: #{cell_forward.1} parent=5 // pred_fallthru
      _
    %p130 = scmp.le.s32.totalorder 1, %s8
    %p131 = scmp.lt.s32.totalorder %s8, 3
    %p132 = pnand %p130, %p131
    %p133 = pneg %p132
    // Predicated region
    $region25: #{cell_forward.1} parent=5 // pred_check
      _
    $region26: #{cell_forward.1} parent=5 // pred_check_branch
      %135 = sbr.rel (%p132) target = $region28
    $region27: #{cell_forward.1} parent=5 // pred_region
      %s136 = ssub.s32 %s8, 1
      %p137 = scmp.lt.s32.totalorder %s17, 0
      %s138 = scalar_select %p137, %s17, 0
      %p139 = scmp.lt.s32.totalorder %s18, 1
      %s140 = scalar_select %p139, %s18, 1
      %s141 = smul.addr %s138, 2
      %s142 = sadd.s32 %s140, %s141
      %s143 = smul.addr %s142, 8
      %s144 = scalar_lea.vmem %s0, %s143
      %p145 = pneg %p48
      %p146 = pneg %p45
      %p147 = pneg %p69
      %p148 = pneg %p66
      %p149 = pneg %p97
      %p150 = pneg %p94
      %p151 = scmp.lt.s32.totalorder %s17, 0
      %s152 = scalar_select %p151, %s17, 0
      %p153 = scmp.lt.s32.totalorder %s18, 1
      %s154 = scalar_select %p153, %s18, 1
      %s155 = smul.addr %s152, 2
      %s156 = sadd.s32 %s154, %s155
      %s157 = smul.addr %s156, 8
      %s158 = scalar_lea.vmem %s2, %s157
      %p159 = scmp.lt.s32.totalorder %s17, 0
      %s160 = scalar_select %p159, %s17, 0
      %p161 = scmp.lt.s32.totalorder %s18, 1
      %s162 = scalar_select %p161, %s18, 1
      %s163 = smul.addr %s160, 2
      %s164 = sadd.s32 %s162, %s163
      %s165 = smul.addr %s164, 8
      %s166 = scalar_lea.vmem %s0, %s165
      %p167 = scmp.lt.s32.totalorder %s17, 0
      %s168 = scalar_select %p167, %s17, 0
      %p169 = scmp.lt.s32.totalorder %s18, 1
      %s170 = scalar_select %p169, %s18, 1
      %s171 = smul.addr %s168, 2
      %s172 = sadd.s32 %s170, %s171
      %s173 = smul.addr %s172, 8
      %s174 = scalar_lea.vmem %s2, %s173
      %v176 = vld [vmem:[%s166] sm:$0xff]
      %v177 = vld [vmem:[%s1 + $0x48] sm:$0xff]
      %v178 = vld [vmem:[%s1 + $0x50] sm:$0xff]
      %v179 = vld [vmem:[%s1 + $0x58] sm:$0xff]
      %v180 = vld [vmem:[%s1 + $0x60] sm:$0xff]
      %v181 = vld [vmem:[%s1 + $0x68] sm:$0x1]
      %v182 = vpack.c.bf16 %v178, %v177
      %v183 = vpack.c.bf16 %v180, %v179
      %v184 = vpack.c.bf16 %v181, %v181
      %v185 = vld [vmem:[%s1 + $0x70] sm:$0xff]
      %v186 = vld [vmem:[%s1 + $0x78] sm:$0xff]
      %v187 = vld [vmem:[%s1 + $0x80] sm:$0xff]
      %v188 = vld [vmem:[%s1 + $0x88] sm:$0xff]
      %v189 = vld [vmem:[%s1 + $0x90] sm:$0x1]
      %v190 = vld [vmem:[%s1] sm:$0xff]
      %v191 = vld [vmem:[%s1 + $0x8] sm:$0xff]
      %v192 = vld [vmem:[%s1 + $0x10] sm:$0xff]
      %v193 = vld [vmem:[%s1 + $0x18] sm:$0xff]
      %v194 = vld [vmem:[%s1 + $0x20] sm:$0xff]
      %v195 = vld [vmem:[%s1 + $0x28] sm:$0xff]
      %v196 = vld [vmem:[%s1 + $0x30] sm:$0xff]
      %v197 = vld [vmem:[%s1 + $0x38] sm:$0xff]
      %v198 = vld [vmem:[%s1 + $0x40] sm:$0x1]
      %200 = vset.pattern.permute.xlu0 4
      %201 = vperm.xlu0 %200, %v190
      %v202 = vpop.permute.xlu0 %201
      %205 = vset.pattern.permute.xlu0 4
      %206 = vperm.xlu0 %205, %v191
      %v207 = vpop.permute.xlu0 %206
      %210 = vset.pattern.permute.xlu0 4
      %211 = vperm.xlu0 %210, %v192
      %v212 = vpop.permute.xlu0 %211
      %215 = vset.pattern.permute.xlu0 4
      %216 = vperm.xlu0 %215, %v193
      %v217 = vpop.permute.xlu0 %216
      %220 = vset.pattern.permute.xlu0 4
      %221 = vperm.xlu0 %220, %v194
      %v222 = vpop.permute.xlu0 %221
      %225 = vset.pattern.permute.xlu0 4
      %226 = vperm.xlu0 %225, %v195
      %v227 = vpop.permute.xlu0 %226
      %230 = vset.pattern.permute.xlu0 4
      %231 = vperm.xlu0 %230, %v196
      %v232 = vpop.permute.xlu0 %231
      %235 = vset.pattern.permute.xlu0 4
      %236 = vperm.xlu0 %235, %v197
      %v237 = vpop.permute.xlu0 %236
      %240 = vset.pattern.permute.xlu0 4
      %241 = vperm.xlu0 %240, %v198
      %v242 = vpop.permute.xlu0 %241
      %244 = vset.pattern.permute.xlu0 0
      %245 = vperm.xlu0 %244, %v190
      %v246 = vpop.permute.xlu0 %245
      %248 = vset.pattern.permute.xlu0 0
      %249 = vperm.xlu0 %248, %v191
      %v250 = vpop.permute.xlu0 %249
      %252 = vset.pattern.permute.xlu0 0
      %253 = vperm.xlu0 %252, %v192
      %v254 = vpop.permute.xlu0 %253
      %256 = vset.pattern.permute.xlu0 0
      %257 = vperm.xlu0 %256, %v193
      %v258 = vpop.permute.xlu0 %257
      %260 = vset.pattern.permute.xlu0 0
      %261 = vperm.xlu0 %260, %v194
      %v262 = vpop.permute.xlu0 %261
      %264 = vset.pattern.permute.xlu0 0
      %265 = vperm.xlu0 %264, %v195
      %v266 = vpop.permute.xlu0 %265
      %268 = vset.pattern.permute.xlu0 0
      %269 = vperm.xlu0 %268, %v196
      %v270 = vpop.permute.xlu0 %269
      %272 = vset.pattern.permute.xlu0 0
      %273 = vperm.xlu0 %272, %v197
      %v274 = vpop.permute.xlu0 %273
      %276 = vset.pattern.permute.xlu0 0
      %277 = vperm.xlu0 %276, %v198
      %v278 = vpop.permute.xlu0 %277
      %v280 = vlaneseq
      %v281 = vshrl.u32 %v280, 7
      %v282 = vsub.s32 0, %v281
      %v283 = vrot.slane %v176, %v282
      %v284 = vmul.f32 %v246, %v283
      %v285 = vmul.f32 %v250, %v283
      %v286 = vmul.f32 %v254, %v283
      %v287 = vmul.f32 %v258, %v283
      %v288 = vmul.f32 %v262, %v283
      %v289 = vmul.f32 %v266, %v283
      %v290 = vmul.f32 %v270, %v283
      %v291 = vmul.f32 %v274, %v283
      %v292 = vmul.f32 %v278, %v283
      %v293 = vadd.f32 %v202, %v284
      %v294 = vadd.f32 %v207, %v285
      %v295 = vadd.f32 %v212, %v286
      %v296 = vadd.f32 %v217, %v287
      %v297 = vadd.f32 %v222, %v288
      %v298 = vadd.f32 %v227, %v289
      %v299 = vadd.f32 %v232, %v290
      %v300 = vadd.f32 %v237, %v291
      %v301 = vadd.f32 %v242, %v292
      %302 = vset.pattern.permute.xlu0 1
      %303 = vperm.xlu0 %302, %v190
      %v304 = vpop.permute.xlu0 %303
      %306 = vset.pattern.permute.xlu0 1
      %307 = vperm.xlu0 %306, %v191
      %v308 = vpop.permute.xlu0 %307
      %310 = vset.pattern.permute.xlu0 1
      %311 = vperm.xlu0 %310, %v192
      %v312 = vpop.permute.xlu0 %311
      %314 = vset.pattern.permute.xlu0 1
      %315 = vperm.xlu0 %314, %v193
      %v316 = vpop.permute.xlu0 %315
      %318 = vset.pattern.permute.xlu0 1
      %319 = vperm.xlu0 %318, %v194
      %v320 = vpop.permute.xlu0 %319
      %322 = vset.pattern.permute.xlu0 1
      %323 = vperm.xlu0 %322, %v195
      %v324 = vpop.permute.xlu0 %323
      %326 = vset.pattern.permute.xlu0 1
      %327 = vperm.xlu0 %326, %v196
      %v328 = vpop.permute.xlu0 %327
      %330 = vset.pattern.permute.xlu0 1
      %331 = vperm.xlu0 %330, %v197
      %v332 = vpop.permute.xlu0 %331
      %334 = vset.pattern.permute.xlu0 1
      %335 = vperm.xlu0 %334, %v198
      %v336 = vpop.permute.xlu0 %335
      %v338 = vlaneseq
      %v339 = vshrl.u32 %v338, 7
      %v340 = vsub.s32 1, %v339
      %v341 = vrot.slane %v176, %v340
      %v342 = vmul.f32 %v304, %v341
      %v343 = vmul.f32 %v308, %v341
      %v344 = vmul.f32 %v312, %v341
      %v345 = vmul.f32 %v316, %v341
      %v346 = vmul.f32 %v320, %v341
      %v347 = vmul.f32 %v324, %v341
      %v348 = vmul.f32 %v328, %v341
      %v349 = vmul.f32 %v332, %v341
      %v350 = vmul.f32 %v336, %v341
      %v351 = vadd.f32 %v293, %v342
      %v352 = vadd.f32 %v294, %v343
      %v353 = vadd.f32 %v295, %v344
      %v354 = vadd.f32 %v296, %v345
      %v355 = vadd.f32 %v297, %v346
      %v356 = vadd.f32 %v298, %v347
      %v357 = vadd.f32 %v299, %v348
      %v358 = vadd.f32 %v300, %v349
      %v359 = vadd.f32 %v301, %v350
      %360 = vset.pattern.permute.xlu0 2
      %361 = vperm.xlu0 %360, %v190
      %v362 = vpop.permute.xlu0 %361
      %364 = vset.pattern.permute.xlu0 2
      %365 = vperm.xlu0 %364, %v191
      %v366 = vpop.permute.xlu0 %365
      %368 = vset.pattern.permute.xlu0 2
      %369 = vperm.xlu0 %368, %v192
      %v370 = vpop.permute.xlu0 %369
      %372 = vset.pattern.permute.xlu0 2
      %373 = vperm.xlu0 %372, %v193
      %v374 = vpop.permute.xlu0 %373
      %376 = vset.pattern.permute.xlu0 2
      %377 = vperm.xlu0 %376, %v194
      %v378 = vpop.permute.xlu0 %377
      %380 = vset.pattern.permute.xlu0 2
      %381 = vperm.xlu0 %380, %v195
      %v382 = vpop.permute.xlu0 %381
      %384 = vset.pattern.permute.xlu0 2
      %385 = vperm.xlu0 %384, %v196
      %v386 = vpop.permute.xlu0 %385
      %388 = vset.pattern.permute.xlu0 2
      %389 = vperm.xlu0 %388, %v197
      %v390 = vpop.permute.xlu0 %389
      %392 = vset.pattern.permute.xlu0 2
      %393 = vperm.xlu0 %392, %v198
      %v394 = vpop.permute.xlu0 %393
      %v396 = vlaneseq
      %v397 = vshrl.u32 %v396, 7
      %v398 = vsub.s32 2, %v397
      %v399 = vrot.slane %v176, %v398
      %v400 = vmul.f32 %v362, %v399
      %v401 = vmul.f32 %v366, %v399
      %v402 = vmul.f32 %v370, %v399
      %v403 = vmul.f32 %v374, %v399
      %v404 = vmul.f32 %v378, %v399
      %v405 = vmul.f32 %v382, %v399
      %v406 = vmul.f32 %v386, %v399
      %v407 = vmul.f32 %v390, %v399
      %v408 = vmul.f32 %v394, %v399
      %v409 = vadd.f32 %v351, %v400
      %v410 = vadd.f32 %v352, %v401
      %v411 = vadd.f32 %v353, %v402
      %v412 = vadd.f32 %v354, %v403
      %v413 = vadd.f32 %v355, %v404
      %v414 = vadd.f32 %v356, %v405
      %v415 = vadd.f32 %v357, %v406
      %v416 = vadd.f32 %v358, %v407
      %v417 = vadd.f32 %v359, %v408
      %418 = vset.pattern.permute.xlu0 3
      %419 = vperm.xlu0 %418, %v190
      %v420 = vpop.permute.xlu0 %419
      %422 = vset.pattern.permute.xlu0 3
      %423 = vperm.xlu0 %422, %v191
      %v424 = vpop.permute.xlu0 %423
      %426 = vset.pattern.permute.xlu0 3
      %427 = vperm.xlu0 %426, %v192
      %v428 = vpop.permute.xlu0 %427
      %430 = vset.pattern.permute.xlu0 3
      %431 = vperm.xlu0 %430, %v193
      %v432 = vpop.permute.xlu0 %431
      %434 = vset.pattern.permute.xlu0 3
      %435 = vperm.xlu0 %434, %v194
      %v436 = vpop.permute.xlu0 %435
      %438 = vset.pattern.permute.xlu0 3
      %439 = vperm.xlu0 %438, %v195
      %v440 = vpop.permute.xlu0 %439
      %442 = vset.pattern.permute.xlu0 3
      %443 = vperm.xlu0 %442, %v196
      %v444 = vpop.permute.xlu0 %443
      %446 = vset.pattern.permute.xlu0 3
      %447 = vperm.xlu0 %446, %v197
      %v448 = vpop.permute.xlu0 %447
      %450 = vset.pattern.permute.xlu0 3
      %451 = vperm.xlu0 %450, %v198
      %v452 = vpop.permute.xlu0 %451
      %v454 = vlaneseq
      %v455 = vshrl.u32 %v454, 7
      %v456 = vsub.s32 3, %v455
      %v457 = vrot.slane %v176, %v456
      %v458 = vmul.f32 %v420, %v457
      %v459 = vmul.f32 %v424, %v457
      %v460 = vmul.f32 %v428, %v457
      %v461 = vmul.f32 %v432, %v457
      %v462 = vmul.f32 %v436, %v457
      %v463 = vmul.f32 %v440, %v457
      %v464 = vmul.f32 %v444, %v457
      %v465 = vmul.f32 %v448, %v457
      %v466 = vmul.f32 %v452, %v457
      %v467 = vadd.f32 %v409, %v458
      %v468 = vadd.f32 %v410, %v459
      %v469 = vadd.f32 %v411, %v460
      %v470 = vadd.f32 %v412, %v461
      %v471 = vadd.f32 %v413, %v462
      %v472 = vadd.f32 %v414, %v463
      %v473 = vadd.f32 %v415, %v464
      %v474 = vadd.f32 %v416, %v465
      %v475 = vadd.f32 %v417, %v466
      %v476 = vmax.f32 %v467, 0.0
      %v477 = vmax.f32 %v468, 0.0
      %v478 = vmax.f32 %v469, 0.0
      %v479 = vmax.f32 %v470, 0.0
      %v480 = vpack.c.bf16 %v477, %v476
      %v481 = vpack.c.bf16 %v479, %v478
      %v482 = vpack.c.bf16 1.0, 1.0
      %vm483 = vcmask 269312
      %v485 = vsel %vm483, %v182, 0
      %v488 = vsel %vm483, %v183, 0
      %v491 = vsel %vm483, %v184, 0
      %vm493 = vcmask 1040384
      %v494 = vsel 0, 4294967295, 65535
      %v495 = vsel %vm493, %v494, 0
      %v497 = vand.u32 %v482, %v495
      %499 = vmatprep.subr.bf16.mxu0 0
      %500 = vmatpush1.bf16.msra.mxu0 %v480
      %501 = vmatprep.subr.bf16.mxu0 0
      %502 = vmatpush1.bf16.msra.mxu0 %v481
      %503 = vmatprep.subr.bf16.mxu0 0
      %504 = vmatpush1.bf16.msra.mxu0 %v497
      %505 = vmatprep.subr.bf16.mxu0 0
      %506 = vmatpush1.bf16.msra.mxu0 0
      %507 = vmatprep.subr.bf16.mxu0 0
      %508 = vmatpush1.bf16.msra.mxu0 0
      %509 = vmatprep.subr.bf16.mxu0 0
      %510 = vmatpush1.bf16.msra.mxu0 0
      %511 = vmatprep.subr.bf16.mxu0 0
      %512 = vmatpush1.bf16.msra.mxu0 0
      %513 = vmatprep.subr.bf16.mxu0 0
      %514 = vmatpush1.bf16.msra.mxu0 0
      %515 = vmatprep.subr.bf16.mxu0 0
      %516 = vmatpush1.bf16.msra.mxu0 0
      %517 = vmatprep.subr.bf16.mxu0 0
      %518 = vmatpush1.bf16.msra.mxu0 0
      %519 = vmatprep.subr.bf16.mxu0 0
      %520 = vmatpush1.bf16.msra.mxu0 0
      %521 = vmatprep.subr.bf16.mxu0 0
      %522 = vmatpush1.bf16.msra.mxu0 0
      %523 = vmatprep.subr.bf16.mxu0 0
      %524 = vmatpush1.bf16.msra.mxu0 0
      %525 = vmatprep.subr.bf16.mxu0 0
      %526 = vmatpush1.bf16.msra.mxu0 0
      %527 = vmatprep.subr.bf16.mxu0 0
      %528 = vmatpush1.bf16.msra.mxu0 0
      %529 = vmatprep.subr.bf16.mxu0 0
      %530 = vmatpush1.bf16.msra.mxu0 0
      %531 = vmatprep.mubr.bf16.mxu0 0
      %532 = vmatmul.mubr.bf16.gmra.mrb[0].mxu0 %v485
      %v533 = vpop.f32.mrb[0].mxu0
      %v534 = vadd.f32 0.0, %v533
      %v535 = vpop.f32.mrb[0].mxu0
      %v536 = vpop.f32.mrb[0].mxu0
      %v537 = vadd.f32 0.0, %v536
      %v538 = vpop.f32.mrb[0].mxu0
      %539 = vmatprep.mubr.bf16.mxu0 0
      %540 = vmatmul.mubr.bf16.gmra.mrb[0].mxu0 %v488
      %v541 = vpop.f32.mrb[0].mxu0
      %v542 = vadd.f32 0.0, %v541
      %v543 = vpop.f32.mrb[0].mxu0
      %v544 = vpop.f32.mrb[0].mxu0
      %v545 = vadd.f32 0.0, %v544
      %v546 = vpop.f32.mrb[0].mxu0
      %547 = vmatprep.mubr.bf16.mxu0 0
      %548 = vmatmul.mubr.bf16.gmra.mrb[0].mxu0 %v491
      %v549 = vpop.f32.mrb[0].mxu0
      %v550 = vadd.f32 0.0, %v549
      %v551 = vpop.f32.mrb[0].mxu0
      %v552 = vpop.f32.mrb[0].mxu0
      %v553 = vpop.f32.mrb[0].mxu0
      %554 = vdwg.mxu0
      %v555 = vmax.f32 %v471, 0.0
      %v556 = vmax.f32 %v472, 0.0
      %v557 = vmax.f32 %v473, 0.0
      %v558 = vmax.f32 %v474, 0.0
      %v559 = vmax.f32 %v534, 0.0
      %v560 = vmax.f32 %v537, 0.0
      %v561 = vmax.f32 %v542, 0.0
      %v562 = vmax.f32 %v545, 0.0
      %v563 = vadd.f32 %v555, %v559
      %v564 = vadd.f32 %v556, %v560
      %v565 = vadd.f32 %v557, %v561
      %v566 = vadd.f32 %v558, %v562
      %568 = vset.pattern.permute.xlu0 0
      %569 = vperm.xlu0 %568, %v185
      %v570 = vpop.permute.xlu0 %569
      %573 = vset.pattern.permute.xlu0 0
      %574 = vperm.xlu0 %573, %v186
      %v575 = vpop.permute.xlu0 %574
      %578 = vset.pattern.permute.xlu0 0
      %579 = vperm.xlu0 %578, %v187
      %v580 = vpop.permute.xlu0 %579
      %583 = vset.pattern.permute.xlu0 0
      %584 = vperm.xlu0 %583, %v188
      %v585 = vpop.permute.xlu0 %584
      %v587 = vmul.f32 %v570, %v563
      %v588 = vmul.f32 %v575, %v564
      %v589 = vmul.f32 %v580, %v565
      %v590 = vmul.f32 %v585, %v566
      %v591 = vadd.f32 %v587, %v588
      %v592 = vadd.f32 %v591, %v589
      %v593 = vadd.f32 %v592, %v590
      %v594 = vrot.slane %v593, 4
      %v595 = vadd.f32 %v593, %v594
      %v596 = vrot.slane %v595, 2
      %v597 = vadd.f32 %v595, %v596
      %v598 = vrot.slane %v597, 1
      %v599 = vadd.f32 %v597, %v598
      %601 = vset.pattern.permute.xlu0 0
      %602 = vperm.xlu0 %601, %v189
      %v603 = vpop.permute.xlu0 %602
      %v605 = vadd.f32 %v599, %v603
      %v606 = vxor.u32 %v475, 2147483648
      %v607 = vmul.f32 %v606, 1.442695
      %v608 = vpow.pop %v607
      %v609 = vadd.f32 %v608, 1.0
      %v610 = vrcp.pop %v609
      %v611 = vmul.f32 1.0, %v610
      %v612 = vxor.u32 %v550, 2147483648
      %v613 = vmul.f32 %v612, 1.442695
      %v614 = vpow.pop %v613
      %v615 = vadd.f32 %v614, 1.0
      %v616 = vrcp.pop %v615
      %v617 = vmul.f32 1.0, %v616
      %v618 = vadd.f32 %v611, %v617
      %v619 = vxor.u32 %v605, 2147483648
      %v620 = vmul.f32 %v619, 1.442695
      %v621 = vpow.pop %v620
      %v622 = vadd.f32 %v621, 1.0
      %v623 = vrcp.pop %v622
      %v624 = vmul.f32 1.0, %v623
      %v625 = vadd.f32 %v618, %v624
      %v626 = vmul.f32 %v625, 0.33333334
      %v627 = vlaneseq
      %v628 = vshrl.u32 %v627, 7
      %v629 = vsub.s32 4, %v628
      %v630 = vrot.slane %v176, %v629
      %v631 = vmul.f32 %v246, %v630
      %v632 = vmul.f32 %v250, %v630
      %v633 = vmul.f32 %v254, %v630
      %v634 = vmul.f32 %v258, %v630
      %v635 = vmul.f32 %v262, %v630
      %v636 = vmul.f32 %v266, %v630
      %v637 = vmul.f32 %v270, %v630
      %v638 = vmul.f32 %v274, %v630
      %v639 = vmul.f32 %v278, %v630
      %v640 = vadd.f32 %v202, %v631
      %v641 = vadd.f32 %v207, %v632
      %v642 = vadd.f32 %v212, %v633
      %v643 = vadd.f32 %v217, %v634
      %v644 = vadd.f32 %v222, %v635
      %v645 = vadd.f32 %v227, %v636
      %v646 = vadd.f32 %v232, %v637
      %v647 = vadd.f32 %v237, %v638
      %v648 = vadd.f32 %v242, %v639
      %v649 = vlaneseq
      %v650 = vshrl.u32 %v649, 7
      %v651 = vsub.s32 5, %v650
      %v652 = vrot.slane %v176, %v651
      %v653 = vmul.f32 %v304, %v652
      %v654 = vmul.f32 %v308, %v652
      %v655 = vmul.f32 %v312, %v652
      %v656 = vmul.f32 %v316, %v652
      %v657 = vmul.f32 %v320, %v652
      %v658 = vmul.f32 %v324, %v652
      %v659 = vmul.f32 %v328, %v652
      %v660 = vmul.f32 %v332, %v652
      %v661 = vmul.f32 %v336, %v652
      %v662 = vadd.f32 %v640, %v653
      %v663 = vadd.f32 %v641, %v654
      %v664 = vadd.f32 %v642, %v655
      %v665 = vadd.f32 %v643, %v656
      %v666 = vadd.f32 %v644, %v657
      %v667 = vadd.f32 %v645, %v658
      %v668 = vadd.f32 %v646, %v659
      %v669 = vadd.f32 %v647, %v660
      %v670 = vadd.f32 %v648, %v661
      %v671 = vlaneseq
      %v672 = vshrl.u32 %v671, 7
      %v673 = vsub.s32 6, %v672
      %v674 = vrot.slane %v176, %v673
      %v675 = vmul.f32 %v362, %v674
      %v676 = vmul.f32 %v366, %v674
      %v677 = vmul.f32 %v370, %v674
      %v678 = vmul.f32 %v374, %v674
      %v679 = vmul.f32 %v378, %v674
      %v680 = vmul.f32 %v382, %v674
      %v681 = vmul.f32 %v386, %v674
      %v682 = vmul.f32 %v390, %v674
      %v683 = vmul.f32 %v394, %v674
      %v684 = vadd.f32 %v662, %v675
      %v685 = vadd.f32 %v663, %v676
      %v686 = vadd.f32 %v664, %v677
      %v687 = vadd.f32 %v665, %v678
      %v688 = vadd.f32 %v666, %v679
      %v689 = vadd.f32 %v667, %v680
      %v690 = vadd.f32 %v668, %v681
      %v691 = vadd.f32 %v669, %v682
      %v692 = vadd.f32 %v670, %v683
      %v693 = vlaneseq
      %v694 = vshrl.u32 %v693, 7
      %v695 = vsub.s32 7, %v694
      %v696 = vrot.slane %v176, %v695
      %v697 = vmul.f32 %v420, %v696
      %v698 = vmul.f32 %v424, %v696
      %v699 = vmul.f32 %v428, %v696
      %v700 = vmul.f32 %v432, %v696
      %v701 = vmul.f32 %v436, %v696
      %v702 = vmul.f32 %v440, %v696
      %v703 = vmul.f32 %v444, %v696
      %v704 = vmul.f32 %v448, %v696
      %v705 = vmul.f32 %v452, %v696
      %v706 = vadd.f32 %v684, %v697
      %v707 = vadd.f32 %v685, %v698
      %v708 = vadd.f32 %v686, %v699
      %v709 = vadd.f32 %v687, %v700
      %v710 = vadd.f32 %v688, %v701
      %v711 = vadd.f32 %v689, %v702
      %v712 = vadd.f32 %v690, %v703
      %v713 = vadd.f32 %v691, %v704
      %v714 = vadd.f32 %v692, %v705
      %v715 = vmax.f32 %v706, 0.0
      %v716 = vmax.f32 %v707, 0.0
      %v717 = vmax.f32 %v708, 0.0
      %v718 = vmax.f32 %v709, 0.0
      %v719 = vpack.c.bf16 %v716, %v715
      %v720 = vpack.c.bf16 %v718, %v717
      %721 = vmatprep.subr.bf16.mxu0 0
      %722 = vmatpush1.bf16.msra.mxu0 %v719
      %723 = vmatprep.subr.bf16.mxu0 0
      %724 = vmatpush1.bf16.msra.mxu0 %v720
      %725 = vmatprep.subr.bf16.mxu0 0
      %726 = vmatpush1.bf16.msra.mxu0 %v497
      %727 = vmatprep.subr.bf16.mxu0 0
      %728 = vmatpush1.bf16.msra.mxu0 0
      %729 = vmatprep.subr.bf16.mxu0 0
      %730 = vmatpush1.bf16.msra.mxu0 0
      %731 = vmatprep.subr.bf16.mxu0 0
      %732 = vmatpush1.bf16.msra.mxu0 0
      %733 = vmatprep.subr.bf16.mxu0 0
      %734 = vmatpush1.bf16.msra.mxu0 0
      %735 = vmatprep.subr.bf16.mxu0 0
      %736 = vmatpush1.bf16.msra.mxu0 0
      %737 = vmatprep.subr.bf16.mxu0 0
      %738 = vmatpush1.bf16.msra.mxu0 0
      %739 = vmatprep.subr.bf16.mxu0 0
      %740 = vmatpush1.bf16.msra.mxu0 0
      %741 = vmatprep.subr.bf16.mxu0 0
      %742 = vmatpush1.bf16.msra.mxu0 0
      %743 = vmatprep.subr.bf16.mxu0 0
      %744 = vmatpush1.bf16.msra.mxu0 0
      %745 = vmatprep.subr.bf16.mxu0 0
      %746 = vmatpush1.bf16.msra.mxu0 0
      %747 = vmatprep.subr.bf16.mxu0 0
      %748 = vmatpush1.bf16.msra.mxu0 0
      %749 = vmatprep.subr.bf16.mxu0 0
      %750 = vmatpush1.bf16.msra.mxu0 0
      %751 = vmatprep.subr.bf16.mxu0 0
      %752 = vmatpush1.bf16.msra.mxu0 0
      %753 = vmatprep.mubr.bf16.mxu0 0
      %754 = vmatmul.mubr.bf16.gmra.mrb[0].mxu0 %v485
      %v755 = vpop.f32.mrb[0].mxu0
      %v756 = vadd.f32 0.0, %v755
      %v757 = vpop.f32.mrb[0].mxu0
      %v758 = vpop.f32.mrb[0].mxu0
      %v759 = vadd.f32 0.0, %v758
      %v760 = vpop.f32.mrb[0].mxu0
      %761 = vmatprep.mubr.bf16.mxu0 0
      %762 = vmatmul.mubr.bf16.gmra.mrb[0].mxu0 %v488
      %v763 = vpop.f32.mrb[0].mxu0
      %v764 = vadd.f32 0.0, %v763
      %v765 = vpop.f32.mrb[0].mxu0
      %v766 = vpop.f32.mrb[0].mxu0
      %v767 = vadd.f32 0.0, %v766
      %v768 = vpop.f32.mrb[0].mxu0
      %769 = vmatprep.mubr.bf16.mxu0 0
      %770 = vmatmul.mubr.bf16.gmra.mrb[0].mxu0 %v491
      %v771 = vpop.f32.mrb[0].mxu0
      %v772 = vadd.f32 0.0, %v771
      %v773 = vpop.f32.mrb[0].mxu0
      %v774 = vpop.f32.mrb[0].mxu0
      %v775 = vpop.f32.mrb[0].mxu0
      %776 = vdwg.mxu0
      %v777 = vmax.f32 %v710, 0.0
      %v778 = vmax.f32 %v711, 0.0
      %v779 = vmax.f32 %v712, 0.0
      %v780 = vmax.f32 %v713, 0.0
      %v781 = vmax.f32 %v756, 0.0
      %v782 = vmax.f32 %v759, 0.0
      %v783 = vmax.f32 %v764, 0.0
      %v784 = vmax.f32 %v767, 0.0
      %v785 = vadd.f32 %v777, %v781
      %v786 = vadd.f32 %v778, %v782
      %v787 = vadd.f32 %v779, %v783
      %v788 = vadd.f32 %v780, %v784
      %v789 = vmul.f32 %v570, %v785
      %v790 = vmul.f32 %v575, %v786
      %v791 = vmul.f32 %v580, %v787
      %v792 = vmul.f32 %v585, %v788
      %v793 = vadd.f32 %v789, %v790
      %v794 = vadd.f32 %v793, %v791
      %v795 = vadd.f32 %v794, %v792
      %v796 = vrot.slane %v795, 4
      %v797 = vadd.f32 %v795, %v796
      %v798 = vrot.slane %v797, 2
      %v799 = vadd.f32 %v797, %v798
      %v800 = vrot.slane %v799, 1
      %v801 = vadd.f32 %v799, %v800
      %v802 = vadd.f32 %v801, %v603
      %v803 = vxor.u32 %v714, 2147483648
      %v804 = vmul.f32 %v803, 1.442695
      %v805 = vpow.pop %v804
      %v806 = vadd.f32 %v805, 1.0
      %v807 = vrcp.pop %v806
      %v808 = vmul.f32 1.0, %v807
      %v809 = vxor.u32 %v772, 2147483648
      %v810 = vmul.f32 %v809, 1.442695
      %v811 = vpow.pop %v810
      %v812 = vadd.f32 %v811, 1.0
      %v813 = vrcp.pop %v812
      %v814 = vmul.f32 1.0, %v813
      %v815 = vadd.f32 %v808, %v814
      %v816 = vxor.u32 %v802, 2147483648
      %v817 = vmul.f32 %v816, 1.442695
      %v818 = vpow.pop %v817
      %v819 = vadd.f32 %v818, 1.0
      %v820 = vrcp.pop %v819
      %v821 = vmul.f32 1.0, %v820
      %v822 = vadd.f32 %v815, %v821
      %v823 = vmul.f32 %v822, 0.33333334
      %v824 = vlaneseq
      %v825 = vshrl.u32 %v824, 7
      %v826 = vsub.s32 0, %v825
      %v827 = vrot.slane %v626, %v826
      %v828 = vlaneseq
      %v829 = vshrl.u32 %v828, 7
      %v830 = vsub.s32 0, %v829
      %v831 = vrot.slane %v823, %v830
      %vm832 = vcmask 1043456
      %v833 = vsel %vm832, %v827, %v831
      %v834 = vmul.f32 %v176, %v833
      %835 = vst [vmem:[%s174] sm:$0xff] %v834
      %p836 = scmp.lt.s32.totalorder %s17, 0
      %s837 = scalar_select %p836, %s17, 0
      %p838 = scmp.lt.s32.totalorder %s18, 1
      %s839 = scalar_select %p838, %s18, 1
      %s840 = smul.addr %s837, 2
      %s841 = sadd.s32 %s839, %s840
      %s842 = smul.addr %s841, 8
      %s843 = scalar_lea.vmem %s2, %s842
      // Predicated region
      $region29: #{cell_forward.1} parent=27 // pred_check
        %p844 = pneg %p94
      $region30: #{cell_forward.1} parent=27 // pred_check_branch
        %846 = sbr.rel (%p844) target = $region32
      $region31: #{cell_forward.1} parent=27 // pred_region
        _
      $region32: #{cell_forward.1} parent=27 // pred_fallthru
        _
    $region28: #{cell_forward.1} parent=5 // pred_fallthru
      _
    %p847 = scmp.le.s32.totalorder 2, %s8
    // Predicated region
    $region33: #{cell_forward.1} parent=5 // pred_check
      %p848 = pneg %p847
    $region34: #{cell_forward.1} parent=5 // pred_check_branch
      %850 = sbr.rel (%p848) target = $region36
    $region35: #{cell_forward.1} parent=5 // pred_region
      %s851 = ssub.s32 %s8, 2
      // Predicated region
      $region37: #{cell_forward.1} parent=35 // pred_check
        %p852 = pneg %p100
      $region38: #{cell_forward.1} parent=35 // pred_check_branch
        %854 = sbr.rel (%p852) target = $region40
      $region39: #{cell_forward.1} parent=35 // pred_region
        %p855 = scmp.lt.s32.totalorder %s19, 0
        %s856 = scalar_select %p855, %s19, 0
        %p857 = scmp.lt.s32.totalorder %s20, 1
        %s858 = scalar_select %p857, %s20, 1
        %s859 = smul.addr %s856, 2
        %s860 = sadd.s32 %s858, %s859
        %s861 = smul.addr %s860, 8
        %s862 = scalar_lea.vmem %s2, %s861
      $region40: #{cell_forward.1} parent=35 // pred_fallthru
        _
    $region36: #{cell_forward.1} parent=5 // pred_fallthru
      _
  $region6: #{cell_forward.1} parent=0 // loop_footer
    %s12 = sadd.s32 1, %s8
  $region7: #{cell_forward.1} parent=0 // loop_footer_branch
    %7 = sbr.rel target = $region3
  $region8: #{cell_forward.1} parent=0 // loop_exit
    _

</llo_original>
